<compile_context>
chip_gen: v7x
topology: tpu7x:2x2x1
jax: 0.10.0
libtpu: 0.0.40
codegen_flags: <defaults>
</compile_context>

<pallas_src>
import jax
import jax.numpy as jnp
from jax.experimental import pallas as pl
from jax.experimental.pallas import tpu as pltpu


def _attluong_kernel(q_ref, yt_ref, w_ref, b_ref, att_ref, sim_ref):
    # q_ref   : (Bt, Ttq, q_dim)
    # yt_ref  : (Bt, y_dim, Tty)   -- y transposed in the wrapper
    # w_ref   : (q_dim, y_dim)
    # b_ref   : (q_dim, 1)
    # att_ref : (Bt, Ttq, Tty)
    # sim_ref : (Bt, Ttq, 1)       -- same block for every Ty tile (accumulator)
    j = pl.program_id(2)

    @pl.when(j == 0)
    def _init():
        sim_ref[...] = jnp.full(sim_ref.shape, -jnp.inf, dtype=sim_ref.dtype)

    w = w_ref[...]
    b = b_ref[...].astype(jnp.float32)
    bt = q_ref.shape[0]

    for bi in range(bt):  # static unroll over the batch tile
        # Projection, produced already transposed: (q_dim, y_dim) @ (y_dim, Tty)
        # -> NN contraction, f32 accumulation, bias added as a column.
        proj_t = jnp.dot(w, yt_ref[bi], preferred_element_type=jnp.float32) + b
        proj_t = proj_t.astype(q_ref.dtype)
        # Score: (Ttq, q_dim) @ (q_dim, Tty) -> NN contraction, f32 accumulation.
        att = jnp.dot(q_ref[bi], proj_t, preferred_element_type=jnp.float32)
        att_ref[bi] = att.astype(att_ref.dtype)
        # Running max over the Ty grid axis for sim.
        row_max = jnp.max(att, axis=1, keepdims=True)  # (Ttq, 1)
        sim_ref[bi] = jnp.maximum(sim_ref[bi], row_max.astype(sim_ref.dtype))


def _divisor_tile(dim, cap, quantum):
    """Largest t <= cap with dim % t == 0 and t % quantum == 0; else the full dim."""
    if dim <= cap:
        return dim
    start = (cap // quantum) * quantum
    for t in range(start, 0, -quantum):
        if dim % t == 0:
            return t
    return dim


def _plan_tiles(B, Tq, Ty, q_dim, y_dim, itemsize, budget_bytes=24 * 1024 * 1024):
    """Pick (Bt, Ttq, Tty) so the double-buffered working set fits the budget."""
    bt = _divisor_tile(B, 8, 1)
    ttq = _divisor_tile(Tq, 256, 8)      # sublane-aligned Tq tiles
    tty = _divisor_tile(Ty, 512, 128)    # lane-dense Ty tiles (or full Ty)

    def working_set(bt_, ttq_, tty_):
        q_blk = bt_ * ttq_ * q_dim
        y_blk = bt_ * y_dim * tty_
        att_blk = bt_ * ttq_ * tty_
        sim_blk = bt_ * ttq_
        w_blk = q_dim * (y_dim + 1)
        return 2 * (q_blk + y_blk + att_blk + sim_blk + w_blk) * itemsize

    def _halve(t, dim, quantum):
        h = t // 2
        return h if (h >= quantum and h % quantum == 0 and dim % h == 0) else t

    while working_set(bt, ttq, tty) > budget_bytes:
        if (h := _halve(tty, Ty, 128)) != tty:
            tty = h
        elif (h := _halve(ttq, Tq, 8)) != ttq:
            ttq = h
        elif (h := _halve(bt, B, 1)) != bt:
            bt = h
        else:
            break
    return bt, ttq, tty


def att_luong(query, y, w, b):
    """query: (B, Tq, q_dim), y: (B, Ty, y_dim), w: (q_dim, y_dim), b: (q_dim,).

    Returns (att, sim) with att: (B, Tq, Ty), sim: (B, 1, Tq), matching
    AttLuong.forward.
    """
    B, Tq, q_dim = query.shape
    By, Ty, y_dim = y.shape
    assert By == B and w.shape == (q_dim, y_dim) and b.shape == (q_dim,)

    out_dtype = query.dtype
    itemsize = jnp.dtype(out_dtype).itemsize
    bt, ttq, tty = _plan_tiles(B, Tq, Ty, q_dim, y_dim, max(itemsize, 4))

    # One-off layout preps done by XLA on the small tensors outside the kernel:
    # y -> (B, y_dim, Ty) so both in-kernel matmuls are NN; bias as a column.
    y_t = jnp.swapaxes(y, 1, 2)
    b_col = b.reshape(q_dim, 1)

    grid = (B // bt, Tq // ttq, Ty // tty)

    grid_spec = pltpu.PrefetchScalarGridSpec(
        num_scalar_prefetch=0,
        grid=grid,
        in_specs=[
            pl.BlockSpec((bt, ttq, q_dim), lambda bb, i, j: (bb, i, 0)),
            pl.BlockSpec((bt, y_dim, tty), lambda bb, i, j: (bb, 0, j)),
            pl.BlockSpec((q_dim, y_dim), lambda bb, i, j: (0, 0)),
            pl.BlockSpec((q_dim, 1), lambda bb, i, j: (0, 0)),
        ],
        out_specs=[
            pl.BlockSpec((bt, ttq, tty), lambda bb, i, j: (bb, i, j)),
            pl.BlockSpec((bt, ttq, 1), lambda bb, i, j: (bb, i, 0)),
        ],
    )

    flops = 2 * B * Ty * y_dim * q_dim + 2 * B * Tq * q_dim * Ty
    bytes_accessed = (
        query.size * jnp.dtype(query.dtype).itemsize
        + y.size * jnp.dtype(y.dtype).itemsize
        + w.size * jnp.dtype(w.dtype).itemsize
        + b.size * jnp.dtype(b.dtype).itemsize
        + (B * Tq * Ty + B * Tq) * itemsize
    )

    att, sim = pl.pallas_call(
        _attluong_kernel,
        grid_spec=grid_spec,
        out_shape=(
            jax.ShapeDtypeStruct((B, Tq, Ty), out_dtype),
            jax.ShapeDtypeStruct((B, Tq, 1), out_dtype),
        ),
        compiler_params=pltpu.CompilerParams(
            dimension_semantics=("parallel", "parallel", "arbitrary"),
            vmem_limit_bytes=48 * 1024 * 1024,
        ),
        cost_estimate=pl.CostEstimate(
            flops=flops, transcendentals=0, bytes_accessed=bytes_accessed
        ),
    )(query, y_t, w, b_col)

    # (B, Tq, 1) -> (B, 1, Tq): tiny reshape handled by XLA in the wrapper.
    return att, sim.reshape(B, 1, Tq)


def _reference(query, y, w, b):
    wy = jnp.einsum("btd,qd->btq", y, w) + b          # (B, Ty, q_dim)
    att = jnp.einsum("bsq,btq->bst", query, wy)        # (B, Tq, Ty)
    sim = jnp.max(att, axis=2)[:, None, :]             # (B, 1, Tq)
    return att, sim


if __name__ == "__main__":
    # Small shapes consistent with the module's forward.
    B, Tq, Ty = 2, 8, 8
    q_dim, y_dim = 32, 16

    key = jax.random.PRNGKey(0)
    kq, ky, kw, kb = jax.random.split(key, 4)
    query = jax.random.normal(kq, (B, Tq, q_dim), dtype=jnp.float32)
    y = jax.random.normal(ky, (B, Ty, y_dim), dtype=jnp.float32)
    # nn.Linear(y_dim, q_dim): weight (q_dim, y_dim), bias (q_dim,)
    w = jax.random.normal(kw, (q_dim, y_dim), dtype=jnp.float32) * 0.1
    b = jax.random.normal(kb, (q_dim,), dtype=jnp.float32) * 0.1

    att, sim = att_luong(query, y, w, b)
    jax.block_until_ready((att, sim))

    att_ref, sim_ref = _reference(query, y, w, b)
    assert att.shape == (B, Tq, Ty) and sim.shape == (B, 1, Tq)
    assert jnp.allclose(att, att_ref, atol=1e-5, rtol=1e-5)
    assert jnp.allclose(sim, sim_ref, atol=1e-5, rtol=1e-5)

    print("KERNEL_OK")
</pallas_src>

<mosaic_0001>
module attributes {stable_mosaic.version = 11 : i64} {
  func.func @_attluong_kernel(%arg0: i32, %arg1: i32, %arg2: i32, %arg3: memref<2x8x32xf32, #tpu.memory_space<vmem>>, %arg4: memref<2x16x8xf32, #tpu.memory_space<vmem>>, %arg5: memref<32x16xf32, #tpu.memory_space<vmem>>, %arg6: memref<32x1xf32, #tpu.memory_space<vmem>>, %arg7: memref<2x8x8xf32, #tpu.memory_space<vmem>>, %arg8: memref<2x8x1xf32, #tpu.memory_space<vmem>>) attributes {dimension_semantics = [#tpu.dimension_semantics<parallel>, #tpu.dimension_semantics<parallel>, #tpu.dimension_semantics<arbitrary>], iteration_bounds = array<i64: 1, 1, 1>, scalar_prefetch = 0 : i64, scratch_operands = 0 : i64, tpu.core_type = #tpu.core_type<tc>, window_params = [{transform_indices = @transform_0, window_bounds = array<i64: 2, 8, 32>}, {transform_indices = @transform_1, window_bounds = array<i64: 2, 16, 8>}, {pipeline_mode = #tpu.pipeline_mode<synchronous>, transform_indices = @transform_2, window_bounds = array<i64: 32, 16>}, {pipeline_mode = #tpu.pipeline_mode<synchronous>, transform_indices = @transform_3, window_bounds = array<i64: 32, 1>}, {transform_indices = @transform_4, window_bounds = array<i64: 2, 8, 8>}, {transform_indices = @transform_5, window_bounds = array<i64: 2, 8, 1>}]} {
    %c0_i32 = arith.constant 0 : i32
    %0 = arith.cmpi eq, %arg2, %c0_i32 : i32
    %1 = arith.extui %0 : i1 to i32
    %c0_i32_0 = arith.constant 0 : i32
    %2 = arith.cmpi ne, %1, %c0_i32_0 : i32
    scf.if %2 {
      %cst_38 = arith.constant 0xFF800000 : f32
      %43 = vector.broadcast %cst_38 : f32 to vector<2x8x1xf32>
      %c0_39 = arith.constant 0 : index
      %c0_40 = arith.constant 0 : index
      %c0_41 = arith.constant 0 : index
      %44 = vector.load %arg8[%c0_39, %c0_40, %c0_41] : memref<2x8x1xf32, #tpu.memory_space<vmem>>, vector<2x8x1xf32>
      tpu.vector_store %arg8[%c0_39, %c0_40, %c0_41], %43 {strides = array<i32>} : memref<2x8x1xf32, #tpu.memory_space<vmem>>, vector<2x8x1xf32>,
    } else {
    }
    %c0 = arith.constant 0 : index
    %c0_1 = arith.constant 0 : index
    %3 = vector.load %arg5[%c0, %c0_1] : memref<32x16xf32, #tpu.memory_space<vmem>>, vector<32x16xf32>
    %c0_2 = arith.constant 0 : index
    %c0_3 = arith.constant 0 : index
    %4 = vector.load %arg6[%c0_2, %c0_3] : memref<32x1xf32, #tpu.memory_space<vmem>>, vector<32x1xf32>
    %c0_4 = arith.constant 0 : index
    %c0_5 = arith.constant 0 : index
    %c0_6 = arith.constant 0 : index
    %5 = vector.load %arg4[%c0_4, %c0_5, %c0_6] : memref<2x16x8xf32, #tpu.memory_space<vmem>>, vector<1x16x8xf32>
    %6 = vector.shape_cast %5 : vector<1x16x8xf32> to vector<16x8xf32>
    %cst = arith.constant dense<0.000000e+00> : vector<32x8xf32>
    %7 = tpu.matmul %3, %6, %cst {dimension_numbers = #tpu.dot_dimension_numbers<[1], [0], [0], [1], [0, 0, 1, 1], [], []>} : vector<32x16xf32>, vector<16x8xf32>, vector<32x8xf32> -> vector<32x8xf32>
    %8 = vector.broadcast %4 : vector<32x1xf32> to vector<32x8xf32>
    %9 = arith.addf %7, %8 : vector<32x8xf32>
    %c0_7 = arith.constant 0 : index
    %c0_8 = arith.constant 0 : index
    %c0_9 = arith.constant 0 : index
    %10 = vector.load %arg3[%c0_7, %c0_8, %c0_9] : memref<2x8x32xf32, #tpu.memory_space<vmem>>, vector<1x8x32xf32>
    %11 = vector.shape_cast %10 : vector<1x8x32xf32> to vector<8x32xf32>
    %cst_10 = arith.constant dense<0.000000e+00> : vector<8x8xf32>
    %12 = tpu.matmul %11, %9, %cst_10 {dimension_numbers = #tpu.dot_dimension_numbers<[1], [0], [0], [1], [0, 0, 1, 1], [], []>} : vector<8x32xf32>, vector<32x8xf32>, vector<8x8xf32> -> vector<8x8xf32>
    %c0_11 = arith.constant 0 : index
    %c0_12 = arith.constant 0 : index
    %c0_13 = arith.constant 0 : index
    %13 = vector.load %arg7[%c0_11, %c0_12, %c0_13] : memref<2x8x8xf32, #tpu.memory_space<vmem>>, vector<1x8x8xf32>
    %14 = vector.shape_cast %13 : vector<1x8x8xf32> to vector<8x8xf32>
    %15 = vector.shape_cast %12 : vector<8x8xf32> to vector<1x8x8xf32>
    tpu.vector_store %arg7[%c0_11, %c0_12, %c0_13], %15 {strides = array<i32>} : memref<2x8x8xf32, #tpu.memory_space<vmem>>, vector<1x8x8xf32>,
    %cst_14 = arith.constant dense<0xFF800000> : vector<8xf32>
    %16 = vector.multi_reduction <maximumf>, %12, %cst_14 [1] : vector<8x8xf32> to vector<8xf32>
    %17 = vector.shape_cast %16 : vector<8xf32> to vector<8x1xf32>
    %c0_15 = arith.constant 0 : index
    %c0_16 = arith.constant 0 : index
    %c0_17 = arith.constant 0 : index
    %18 = vector.load %arg8[%c0_15, %c0_16, %c0_17] : memref<2x8x1xf32, #tpu.memory_space<vmem>>, vector<1x8x1xf32>
    %19 = vector.shape_cast %18 : vector<1x8x1xf32> to vector<8x1xf32>
    %20 = arith.maximumf %19, %17 : vector<8x1xf32>
    %c0_18 = arith.constant 0 : index
    %c0_19 = arith.constant 0 : index
    %c0_20 = arith.constant 0 : index
    %21 = vector.load %arg8[%c0_18, %c0_19, %c0_20] : memref<2x8x1xf32, #tpu.memory_space<vmem>>, vector<1x8x1xf32>
    %22 = vector.shape_cast %21 : vector<1x8x1xf32> to vector<8x1xf32>
    %23 = vector.shape_cast %20 : vector<8x1xf32> to vector<1x8x1xf32>
    tpu.vector_store %arg8[%c0_18, %c0_19, %c0_20], %23 {strides = array<i32>} : memref<2x8x1xf32, #tpu.memory_space<vmem>>, vector<1x8x1xf32>,
    %c1 = arith.constant 1 : index
    %c0_21 = arith.constant 0 : index
    %c0_22 = arith.constant 0 : index
    %24 = vector.load %arg4[%c1, %c0_21, %c0_22] : memref<2x16x8xf32, #tpu.memory_space<vmem>>, vector<1x16x8xf32>
    %25 = vector.shape_cast %24 : vector<1x16x8xf32> to vector<16x8xf32>
    %cst_23 = arith.constant dense<0.000000e+00> : vector<32x8xf32>
    %26 = tpu.matmul %3, %25, %cst_23 {dimension_numbers = #tpu.dot_dimension_numbers<[1], [0], [0], [1], [0, 0, 1, 1], [], []>} : vector<32x16xf32>, vector<16x8xf32>, vector<32x8xf32> -> vector<32x8xf32>
    %27 = vector.broadcast %4 : vector<32x1xf32> to vector<32x8xf32>
    %28 = arith.addf %26, %27 : vector<32x8xf32>
    %c1_24 = arith.constant 1 : index
    %c0_25 = arith.constant 0 : index
    %c0_26 = arith.constant 0 : index
    %29 = vector.load %arg3[%c1_24, %c0_25, %c0_26] : memref<2x8x32xf32, #tpu.memory_space<vmem>>, vector<1x8x32xf32>
    %30 = vector.shape_cast %29 : vector<1x8x32xf32> to vector<8x32xf32>
    %cst_27 = arith.constant dense<0.000000e+00> : vector<8x8xf32>
    %31 = tpu.matmul %30, %28, %cst_27 {dimension_numbers = #tpu.dot_dimension_numbers<[1], [0], [0], [1], [0, 0, 1, 1], [], []>} : vector<8x32xf32>, vector<32x8xf32>, vector<8x8xf32> -> vector<8x8xf32>
    %c1_28 = arith.constant 1 : index
    %c0_29 = arith.constant 0 : index
    %c0_30 = arith.constant 0 : index
    %32 = vector.load %arg7[%c1_28, %c0_29, %c0_30] : memref<2x8x8xf32, #tpu.memory_space<vmem>>, vector<1x8x8xf32>
    %33 = vector.shape_cast %32 : vector<1x8x8xf32> to vector<8x8xf32>
    %34 = vector.shape_cast %31 : vector<8x8xf32> to vector<1x8x8xf32>
    tpu.vector_store %arg7[%c1_28, %c0_29, %c0_30], %34 {strides = array<i32>} : memref<2x8x8xf32, #tpu.memory_space<vmem>>, vector<1x8x8xf32>,
    %cst_31 = arith.constant dense<0xFF800000> : vector<8xf32>
    %35 = vector.multi_reduction <maximumf>, %31, %cst_31 [1] : vector<8x8xf32> to vector<8xf32>
    %36 = vector.shape_cast %35 : vector<8xf32> to vector<8x1xf32>
    %c1_32 = arith.constant 1 : index
    %c0_33 = arith.constant 0 : index
    %c0_34 = arith.constant 0 : index
    %37 = vector.load %arg8[%c1_32, %c0_33, %c0_34] : memref<2x8x1xf32, #tpu.memory_space<vmem>>, vector<1x8x1xf32>
    %38 = vector.shape_cast %37 : vector<1x8x1xf32> to vector<8x1xf32>
    %39 = arith.maximumf %38, %36 : vector<8x1xf32>
    %c1_35 = arith.constant 1 : index
    %c0_36 = arith.constant 0 : index
    %c0_37 = arith.constant 0 : index
    %40 = vector.load %arg8[%c1_35, %c0_36, %c0_37] : memref<2x8x1xf32, #tpu.memory_space<vmem>>, vector<1x8x1xf32>
    %41 = vector.shape_cast %40 : vector<1x8x1xf32> to vector<8x1xf32>
    %42 = vector.shape_cast %39 : vector<8x1xf32> to vector<1x8x1xf32>
    tpu.vector_store %arg8[%c1_35, %c0_36, %c0_37], %42 {strides = array<i32>} : memref<2x8x1xf32, #tpu.memory_space<vmem>>, vector<1x8x1xf32>,
    return
  }
  func.func @transform_0(%arg0: i32, %arg1: i32, %arg2: i32) -> (i32, i32, i32) {
    %c0_i32 = arith.constant 0 : i32
    %c0_i32_0 = arith.constant 0 : i32
    return %arg0, %arg1, %c0_i32 : i32, i32, i32
  }
  func.func @transform_1(%arg0: i32, %arg1: i32, %arg2: i32) -> (i32, i32, i32) {
    %c0_i32 = arith.constant 0 : i32
    %c0_i32_0 = arith.constant 0 : i32
    return %arg0, %c0_i32, %arg2 : i32, i32, i32
  }
  func.func @transform_2(%arg0: i32, %arg1: i32, %arg2: i32) -> (i32, i32) {
    %c0_i32 = arith.constant 0 : i32
    %c0_i32_0 = arith.constant 0 : i32
    %c0_i32_1 = arith.constant 0 : i32
    return %c0_i32, %c0_i32_0 : i32, i32
  }
  func.func @transform_3(%arg0: i32, %arg1: i32, %arg2: i32) -> (i32, i32) {
    %c0_i32 = arith.constant 0 : i32
    %c0_i32_0 = arith.constant 0 : i32
    %c0_i32_1 = arith.constant 0 : i32
    return %c0_i32, %c0_i32_0 : i32, i32
  }
  func.func @transform_4(%arg0: i32, %arg1: i32, %arg2: i32) -> (i32, i32, i32) {
    %c0_i32 = arith.constant 0 : i32
    return %arg0, %arg1, %arg2 : i32, i32, i32
  }
  func.func @transform_5(%arg0: i32, %arg1: i32, %arg2: i32) -> (i32, i32, i32) {
    %c0_i32 = arith.constant 0 : i32
    %c0_i32_0 = arith.constant 0 : i32
    return %arg0, %arg1, %c0_i32 : i32, i32, i32
  }
}

</mosaic_0001>

<llo_original>
// kernel: tpu_custom_call.1
$region0: #{tpu_custom_call.1}
  #allocation0 [shape = 'u32[]', space=smem, size = 0x4, offset = 0x4, fixed_abs, tag = 'smem constant byte address 0x4 - core index']
  #allocation1 [shape = 'u32[144,128]{1,0:T(1,128)}', space=vmem, size = 0x12000, scoped, tag = 'internal scratch']
  %s0 = inlined_call_operand.vmem [shape: f32[2,8,32], index: 0, kind: input, shape index: {}]
  %s1 = inlined_call_operand.vmem [shape: f32[2,16,8], index: 1, kind: input, shape index: {}]
  %s2 = inlined_call_operand.vmem [shape: f32[32,16], index: 2, kind: input, shape index: {}]
  %s3 = inlined_call_operand.vmem [shape: f32[32,1], index: 3, kind: input, shape index: {}]
  %s4 = inlined_call_operand.hbm [shape: f32[2,8,8], index: 4, kind: output, shape index: {0}]
  %s5 = inlined_call_operand.vmem [shape: f32[2,8,1], index: 5, kind: output, shape index: {1}]
  %6 = xla_tuple %s4, %s5
  %s7 = sld [smem:[#allocation0]]
  $region38: #{tpu_custom_call.1} parent=0
    _
  %s9 = ssub.s32 1, %s7
  %s10 = scalar_select 0, %s9, %s7
  $region1: #{tpu_custom_call.1} parent=0
    #allocation2 [shape = 'u8[8192]{0}', space=vmem, size = 0x2000, scoped, tag = 'output window, operand 0, single buffered']
    #allocation3 [shape = 's32[1]{0}', space=sflag, size = 0x4, scoped, tag = 'scoped memory for tpu_custom_call.1']
    %11 = vsyncpa [#allocation3], 0
    // Predicated region
    $region2: #{tpu_custom_call.1} parent=1 // pred_check
      _
    $region3: #{tpu_custom_call.1} parent=1 // pred_check_branch
      %13 = sbr.rel (0) target = $region5
    $region4: #{tpu_custom_call.1} parent=1 // pred_region
      _
    $region5: #{tpu_custom_call.1} parent=1 // pred_fallthru
      _
    // Predicated region
    $region6: #{tpu_custom_call.1} parent=1 // pred_check
      _
    $region7: #{tpu_custom_call.1} parent=1 // pred_check_branch
      %15 = sbr.rel (0) target = $region9
    $region8: #{tpu_custom_call.1} parent=1 // pred_region
      _
    $region9: #{tpu_custom_call.1} parent=1 // pred_fallthru
      _
    // Predicated region
    $region10: #{tpu_custom_call.1} parent=1 // pred_check
      _
    $region11: #{tpu_custom_call.1} parent=1 // pred_check_branch
      %17 = sbr.rel (0) target = $region13
    $region12: #{tpu_custom_call.1} parent=1 // pred_region
      _
    $region13: #{tpu_custom_call.1} parent=1 // pred_fallthru
      _
    // Predicated region
    $region14: #{tpu_custom_call.1} parent=1 // pred_check
      _
    $region15: #{tpu_custom_call.1} parent=1 // pred_check_branch
      %19 = sbr.rel (0) target = $region17
    $region16: #{tpu_custom_call.1} parent=1 // pred_region
      _
    $region17: #{tpu_custom_call.1} parent=1 // pred_fallthru
      _
    %p20 = scmp.eq.s32.totalorder 0, 0
    // Predicated region
    $region18: #{tpu_custom_call.1} parent=1 // pred_check
      %p21 = pneg %p20
    $region19: #{tpu_custom_call.1} parent=1 // pred_check_branch
      %23 = sbr.rel (%p21) target = $region21
    $region20: #{tpu_custom_call.1} parent=1 // pred_region
      %vm24 = vcmask 7168
      %25 = vst.msk [vmem:[%s5] sm:$0xff] %vm24, -inf
      %26 = vst.msk [vmem:[%s5 + $0x8] sm:$0xff] %vm24, -inf
    $region21: #{tpu_custom_call.1} parent=1 // pred_fallthru
      _
    %v27 = vld [vmem:[%s2] sm:$0xff]
    %v28 = vld [vmem:[%s2 + $0x8] sm:$0xff]
    %v29 = vld [vmem:[%s2 + $0x10] sm:$0xff]
    %v30 = vld [vmem:[%s2 + $0x18] sm:$0xff]
    %v31 = vld [vmem:[%s3] sm:$0xff]
    %v32 = vld [vmem:[%s3 + $0x8] sm:$0xff]
    %v33 = vld [vmem:[%s3 + $0x10] sm:$0xff]
    %v34 = vld [vmem:[%s3 + $0x18] sm:$0xff]
    %v35 = vld [vmem:[%s1] sm:$0xff]
    %v36 = vld [vmem:[%s1 + $0x8] sm:$0xff]
    %38 = vset.pattern.permute.xlu0 0
    %39 = vperm.xlu0 %38, %v31
    %v40 = vpop.permute.xlu0 %39
    %43 = vset.pattern.permute.xlu0 0
    %44 = vperm.xlu0 %43, %v32
    %v45 = vpop.permute.xlu0 %44
    %48 = vset.pattern.permute.xlu0 0
    %49 = vperm.xlu0 %48, %v33
    %v50 = vpop.permute.xlu0 %49
    %53 = vset.pattern.permute.xlu0 0
    %54 = vperm.xlu0 %53, %v34
    %v55 = vpop.permute.xlu0 %54
    %vm57 = vcmask 130048
    %v59 = vsel %vm57, %v27, 0
    %v62 = vsel %vm57, %v28, 0
    %v65 = vsel %vm57, %v29, 0
    %v68 = vsel %vm57, %v30, 0
    %70 = vmatprep.subr.mxu0 0.0
    %71 = vmatpush1.msra.mxu0 %v35
    %72 = vmatprep.subr.mxu0 0.0
    %73 = vmatpush1.msra.mxu0 %v36
    %74 = vmatprep.subr.mxu0 0.0
    %75 = vmatpush1.msra.mxu0 0.0
    %76 = vmatprep.subr.mxu0 0.0
    %77 = vmatpush1.msra.mxu0 0.0
    %78 = vmatprep.subr.mxu0 0.0
    %79 = vmatpush1.msra.mxu0 0.0
    %80 = vmatprep.subr.mxu0 0.0
    %81 = vmatpush1.msra.mxu0 0.0
    %82 = vmatprep.subr.mxu0 0.0
    %83 = vmatpush1.msra.mxu0 0.0
    %84 = vmatprep.subr.mxu0 0.0
    %85 = vmatpush1.msra.mxu0 0.0
    %86 = vmatprep.subr.mxu0 0.0
    %87 = vmatpush1.msra.mxu0 0.0
    %88 = vmatprep.subr.mxu0 0.0
    %89 = vmatpush1.msra.mxu0 0.0
    %90 = vmatprep.subr.mxu0 0.0
    %91 = vmatpush1.msra.mxu0 0.0
    %92 = vmatprep.subr.mxu0 0.0
    %93 = vmatpush1.msra.mxu0 0.0
    %94 = vmatprep.subr.mxu0 0.0
    %95 = vmatpush1.msra.mxu0 0.0
    %96 = vmatprep.subr.mxu0 0.0
    %97 = vmatpush1.msra.mxu0 0.0
    %98 = vmatprep.subr.mxu0 0.0
    %99 = vmatpush1.msra.mxu0 0.0
    %100 = vmatprep.subr.mxu0 0.0
    %101 = vmatpush1.msra.mxu0 0.0
    %102 = vmatprep.subr.mxu0 0.0
    %103 = vmatpush1.msra.mxu0 0.0
    %104 = vmatprep.subr.mxu0 0.0
    %105 = vmatpush1.msra.mxu0 0.0
    %106 = vmatprep.subr.mxu0 0.0
    %107 = vmatpush1.msra.mxu0 0.0
    %108 = vmatprep.subr.mxu0 0.0
    %109 = vmatpush1.msra.mxu0 0.0
    %110 = vmatprep.subr.mxu0 0.0
    %111 = vmatpush1.msra.mxu0 0.0
    %112 = vmatprep.subr.mxu0 0.0
    %113 = vmatpush1.msra.mxu0 0.0
    %114 = vmatprep.subr.mxu0 0.0
    %115 = vmatpush1.msra.mxu0 0.0
    %116 = vmatprep.subr.mxu0 0.0
    %117 = vmatpush1.msra.mxu0 0.0
    %118 = vmatprep.subr.mxu0 0.0
    %119 = vmatpush1.msra.mxu0 0.0
    %120 = vmatprep.subr.mxu0 0.0
    %121 = vmatpush1.msra.mxu0 0.0
    %122 = vmatprep.subr.mxu0 0.0
    %123 = vmatpush1.msra.mxu0 0.0
    %124 = vmatprep.subr.mxu0 0.0
    %125 = vmatpush1.msra.mxu0 0.0
    %126 = vmatprep.subr.mxu0 0.0
    %127 = vmatpush1.msra.mxu0 0.0
    %128 = vmatprep.subr.mxu0 0.0
    %129 = vmatpush1.msra.mxu0 0.0
    %130 = vmatprep.subr.mxu0 0.0
    %131 = vmatpush1.msra.mxu0 0.0
    %132 = vmatprep.subr.mxu0 0.0
    %133 = vmatpush1.msra.mxu0 0.0
    %134 = vmatprep.mubr.f32.mxu0 0.0
    %135 = vmatmul.mubr.f32.gmra.mrb[0].mxu0 %v59
    %v136 = vpop.f32.mrb[0].mxu0
    %v137 = vadd.f32 %v40, %v136
    %v138 = vpop.f32.mrb[0].mxu0
    %139 = vmatprep.mubr.f32.mxu0 0.0
    %140 = vmatmul.mubr.f32.gmra.mrb[0].mxu0 %v62
    %v141 = vpop.f32.mrb[0].mxu0
    %v142 = vadd.f32 %v45, %v141
    %v143 = vpop.f32.mrb[0].mxu0
    %144 = vmatprep.mubr.f32.mxu0 0.0
    %145 = vmatmul.mubr.f32.gmra.mrb[0].mxu0 %v65
    %v146 = vpop.f32.mrb[0].mxu0
    %v147 = vadd.f32 %v50, %v146
    %v148 = vpop.f32.mrb[0].mxu0
    %149 = vmatprep.mubr.f32.mxu0 0.0
    %150 = vmatmul.mubr.f32.gmra.mrb[0].mxu0 %v68
    %v151 = vpop.f32.mrb[0].mxu0
    %v152 = vadd.f32 %v55, %v151
    %v153 = vpop.f32.mrb[0].mxu0
    %154 = vdwg.mxu0
    %v155 = vld [vmem:[%s0] sm:$0xff]
    %vm156 = vcmask 261120
    %v158 = vsel %vm156, %v155, 0
    %160 = vmatprep.subr.mxu0 0.0
    %161 = vmatpush1.msra.mxu0 %v137
    %162 = vmatprep.subr.mxu0 0.0
    %163 = vmatpush1.msra.mxu0 %v142
    %164 = vmatprep.subr.mxu0 0.0
    %165 = vmatpush1.msra.mxu0 %v147
    %166 = vmatprep.subr.mxu0 0.0
    %167 = vmatpush1.msra.mxu0 %v152
    %168 = vmatprep.subr.mxu0 0.0
    %169 = vmatpush1.msra.mxu0 0.0
    %170 = vmatprep.subr.mxu0 0.0
    %171 = vmatpush1.msra.mxu0 0.0
    %172 = vmatprep.subr.mxu0 0.0
    %173 = vmatpush1.msra.mxu0 0.0
    %174 = vmatprep.subr.mxu0 0.0
    %175 = vmatpush1.msra.mxu0 0.0
    %176 = vmatprep.subr.mxu0 0.0
    %177 = vmatpush1.msra.mxu0 0.0
    %178 = vmatprep.subr.mxu0 0.0
    %179 = vmatpush1.msra.mxu0 0.0
    %180 = vmatprep.subr.mxu0 0.0
    %181 = vmatpush1.msra.mxu0 0.0
    %182 = vmatprep.subr.mxu0 0.0
    %183 = vmatpush1.msra.mxu0 0.0
    %184 = vmatprep.subr.mxu0 0.0
    %185 = vmatpush1.msra.mxu0 0.0
    %186 = vmatprep.subr.mxu0 0.0
    %187 = vmatpush1.msra.mxu0 0.0
    %188 = vmatprep.subr.mxu0 0.0
    %189 = vmatpush1.msra.mxu0 0.0
    %190 = vmatprep.subr.mxu0 0.0
    %191 = vmatpush1.msra.mxu0 0.0
    %192 = vmatprep.subr.mxu0 0.0
    %193 = vmatpush1.msra.mxu0 0.0
    %194 = vmatprep.subr.mxu0 0.0
    %195 = vmatpush1.msra.mxu0 0.0
    %196 = vmatprep.subr.mxu0 0.0
    %197 = vmatpush1.msra.mxu0 0.0
    %198 = vmatprep.subr.mxu0 0.0
    %199 = vmatpush1.msra.mxu0 0.0
    %200 = vmatprep.subr.mxu0 0.0
    %201 = vmatpush1.msra.mxu0 0.0
    %202 = vmatprep.subr.mxu0 0.0
    %203 = vmatpush1.msra.mxu0 0.0
    %204 = vmatprep.subr.mxu0 0.0
    %205 = vmatpush1.msra.mxu0 0.0
    %206 = vmatprep.subr.mxu0 0.0
    %207 = vmatpush1.msra.mxu0 0.0
    %208 = vmatprep.subr.mxu0 0.0
    %209 = vmatpush1.msra.mxu0 0.0
    %210 = vmatprep.subr.mxu0 0.0
    %211 = vmatpush1.msra.mxu0 0.0
    %212 = vmatprep.subr.mxu0 0.0
    %213 = vmatpush1.msra.mxu0 0.0
    %214 = vmatprep.subr.mxu0 0.0
    %215 = vmatpush1.msra.mxu0 0.0
    %216 = vmatprep.subr.mxu0 0.0
    %217 = vmatpush1.msra.mxu0 0.0
    %218 = vmatprep.subr.mxu0 0.0
    %219 = vmatpush1.msra.mxu0 0.0
    %220 = vmatprep.subr.mxu0 0.0
    %221 = vmatpush1.msra.mxu0 0.0
    %222 = vmatprep.subr.mxu0 0.0
    %223 = vmatpush1.msra.mxu0 0.0
    %224 = vmatprep.mubr.f32.mxu0 0.0
    %225 = vmatmul.mubr.f32.gmra.mrb[0].mxu0 %v158
    %v226 = vpop.f32.mrb[0].mxu0
    %v227 = vadd.f32 0.0, %v226
    %v228 = vpop.f32.mrb[0].mxu0
    %229 = vdwg.mxu0
    %vm230 = vcmask 64512
    %231 = vst.msk [vmem:[#allocation2] sm:$0xff] %vm230, %v227
    %v232 = vsel %vm230, %v227, -inf
    %233 = vmax.xlane.f32.xlu0 %v232
    %v234 = vpop.xlane.xlu0 %233
    %v235 = vld [vmem:[%s5] sm:$0xff]
    %v236 = vmax.f32 %v235, %v234
    %vm237 = vcmask 7168
    %238 = vst.msk [vmem:[%s5] sm:$0xff] %vm237, %v236
    %s239 = scalar_lea.vmem %s1, 16
    %v240 = vld [vmem:[%s239] sm:$0xff]
    %v241 = vld [vmem:[%s239 + $0x8] sm:$0xff]
    %242 = vmatprep.subr.mxu0 0.0
    %243 = vmatpush1.msra.mxu0 %v240
    %244 = vmatprep.subr.mxu0 0.0
    %245 = vmatpush1.msra.mxu0 %v241
    %246 = vmatprep.subr.mxu0 0.0
    %247 = vmatpush1.msra.mxu0 0.0
    %248 = vmatprep.subr.mxu0 0.0
    %249 = vmatpush1.msra.mxu0 0.0
    %250 = vmatprep.subr.mxu0 0.0
    %251 = vmatpush1.msra.mxu0 0.0
    %252 = vmatprep.subr.mxu0 0.0
    %253 = vmatpush1.msra.mxu0 0.0
    %254 = vmatprep.subr.mxu0 0.0
    %255 = vmatpush1.msra.mxu0 0.0
    %256 = vmatprep.subr.mxu0 0.0
    %257 = vmatpush1.msra.mxu0 0.0
    %258 = vmatprep.subr.mxu0 0.0
    %259 = vmatpush1.msra.mxu0 0.0
    %260 = vmatprep.subr.mxu0 0.0
    %261 = vmatpush1.msra.mxu0 0.0
    %262 = vmatprep.subr.mxu0 0.0
    %263 = vmatpush1.msra.mxu0 0.0
    %264 = vmatprep.subr.mxu0 0.0
    %265 = vmatpush1.msra.mxu0 0.0
    %266 = vmatprep.subr.mxu0 0.0
    %267 = vmatpush1.msra.mxu0 0.0
    %268 = vmatprep.subr.mxu0 0.0
    %269 = vmatpush1.msra.mxu0 0.0
    %270 = vmatprep.subr.mxu0 0.0
    %271 = vmatpush1.msra.mxu0 0.0
    %272 = vmatprep.subr.mxu0 0.0
    %273 = vmatpush1.msra.mxu0 0.0
    %274 = vmatprep.subr.mxu0 0.0
    %275 = vmatpush1.msra.mxu0 0.0
    %276 = vmatprep.subr.mxu0 0.0
    %277 = vmatpush1.msra.mxu0 0.0
    %278 = vmatprep.subr.mxu0 0.0
    %279 = vmatpush1.msra.mxu0 0.0
    %280 = vmatprep.subr.mxu0 0.0
    %281 = vmatpush1.msra.mxu0 0.0
    %282 = vmatprep.subr.mxu0 0.0
    %283 = vmatpush1.msra.mxu0 0.0
    %284 = vmatprep.subr.mxu0 0.0
    %285 = vmatpush1.msra.mxu0 0.0
    %286 = vmatprep.subr.mxu0 0.0
    %287 = vmatpush1.msra.mxu0 0.0
    %288 = vmatprep.subr.mxu0 0.0
    %289 = vmatpush1.msra.mxu0 0.0
    %290 = vmatprep.subr.mxu0 0.0
    %291 = vmatpush1.msra.mxu0 0.0
    %292 = vmatprep.subr.mxu0 0.0
    %293 = vmatpush1.msra.mxu0 0.0
    %294 = vmatprep.subr.mxu0 0.0
    %295 = vmatpush1.msra.mxu0 0.0
    %296 = vmatprep.subr.mxu0 0.0
    %297 = vmatpush1.msra.mxu0 0.0
    %298 = vmatprep.subr.mxu0 0.0
    %299 = vmatpush1.msra.mxu0 0.0
    %300 = vmatprep.subr.mxu0 0.0
    %301 = vmatpush1.msra.mxu0 0.0
    %302 = vmatprep.subr.mxu0 0.0
    %303 = vmatpush1.msra.mxu0 0.0
    %304 = vmatprep.subr.mxu0 0.0
    %305 = vmatpush1.msra.mxu0 0.0
    %306 = vmatprep.mubr.f32.mxu0 0.0
    %307 = vmatmul.mubr.f32.gmra.mrb[0].mxu0 %v59
    %v308 = vpop.f32.mrb[0].mxu0
    %v309 = vadd.f32 %v40, %v308
    %v310 = vpop.f32.mrb[0].mxu0
    %311 = vmatprep.mubr.f32.mxu0 0.0
    %312 = vmatmul.mubr.f32.gmra.mrb[0].mxu0 %v62
    %v313 = vpop.f32.mrb[0].mxu0
    %v314 = vadd.f32 %v45, %v313
    %v315 = vpop.f32.mrb[0].mxu0
    %316 = vmatprep.mubr.f32.mxu0 0.0
    %317 = vmatmul.mubr.f32.gmra.mrb[0].mxu0 %v65
    %v318 = vpop.f32.mrb[0].mxu0
    %v319 = vadd.f32 %v50, %v318
    %v320 = vpop.f32.mrb[0].mxu0
    %321 = vmatprep.mubr.f32.mxu0 0.0
    %322 = vmatmul.mubr.f32.gmra.mrb[0].mxu0 %v68
    %v323 = vpop.f32.mrb[0].mxu0
    %v324 = vadd.f32 %v55, %v323
    %v325 = vpop.f32.mrb[0].mxu0
    %326 = vdwg.mxu0
    %s327 = scalar_lea.vmem %s0, 8
    %v328 = vld [vmem:[%s327] sm:$0xff]
    %v330 = vsel %vm156, %v328, 0
    %332 = vmatprep.subr.mxu0 0.0
    %333 = vmatpush1.msra.mxu0 %v309
    %334 = vmatprep.subr.mxu0 0.0
    %335 = vmatpush1.msra.mxu0 %v314
    %336 = vmatprep.subr.mxu0 0.0
    %337 = vmatpush1.msra.mxu0 %v319
    %338 = vmatprep.subr.mxu0 0.0
    %339 = vmatpush1.msra.mxu0 %v324
    %340 = vmatprep.subr.mxu0 0.0
    %341 = vmatpush1.msra.mxu0 0.0
    %342 = vmatprep.subr.mxu0 0.0
    %343 = vmatpush1.msra.mxu0 0.0
    %344 = vmatprep.subr.mxu0 0.0
    %345 = vmatpush1.msra.mxu0 0.0
    %346 = vmatprep.subr.mxu0 0.0
    %347 = vmatpush1.msra.mxu0 0.0
    %348 = vmatprep.subr.mxu0 0.0
    %349 = vmatpush1.msra.mxu0 0.0
    %350 = vmatprep.subr.mxu0 0.0
    %351 = vmatpush1.msra.mxu0 0.0
    %352 = vmatprep.subr.mxu0 0.0
    %353 = vmatpush1.msra.mxu0 0.0
    %354 = vmatprep.subr.mxu0 0.0
    %355 = vmatpush1.msra.mxu0 0.0
    %356 = vmatprep.subr.mxu0 0.0
    %357 = vmatpush1.msra.mxu0 0.0
    %358 = vmatprep.subr.mxu0 0.0
    %359 = vmatpush1.msra.mxu0 0.0
    %360 = vmatprep.subr.mxu0 0.0
    %361 = vmatpush1.msra.mxu0 0.0
    %362 = vmatprep.subr.mxu0 0.0
    %363 = vmatpush1.msra.mxu0 0.0
    %364 = vmatprep.subr.mxu0 0.0
    %365 = vmatpush1.msra.mxu0 0.0
    %366 = vmatprep.subr.mxu0 0.0
    %367 = vmatpush1.msra.mxu0 0.0
    %368 = vmatprep.subr.mxu0 0.0
    %369 = vmatpush1.msra.mxu0 0.0
    %370 = vmatprep.subr.mxu0 0.0
    %371 = vmatpush1.msra.mxu0 0.0
    %372 = vmatprep.subr.mxu0 0.0
    %373 = vmatpush1.msra.mxu0 0.0
    %374 = vmatprep.subr.mxu0 0.0
    %375 = vmatpush1.msra.mxu0 0.0
    %376 = vmatprep.subr.mxu0 0.0
    %377 = vmatpush1.msra.mxu0 0.0
    %378 = vmatprep.subr.mxu0 0.0
    %379 = vmatpush1.msra.mxu0 0.0
    %380 = vmatprep.subr.mxu0 0.0
    %381 = vmatpush1.msra.mxu0 0.0
    %382 = vmatprep.subr.mxu0 0.0
    %383 = vmatpush1.msra.mxu0 0.0
    %384 = vmatprep.subr.mxu0 0.0
    %385 = vmatpush1.msra.mxu0 0.0
    %386 = vmatprep.subr.mxu0 0.0
    %387 = vmatpush1.msra.mxu0 0.0
    %388 = vmatprep.subr.mxu0 0.0
    %389 = vmatpush1.msra.mxu0 0.0
    %390 = vmatprep.subr.mxu0 0.0
    %391 = vmatpush1.msra.mxu0 0.0
    %392 = vmatprep.subr.mxu0 0.0
    %393 = vmatpush1.msra.mxu0 0.0
    %394 = vmatprep.subr.mxu0 0.0
    %395 = vmatpush1.msra.mxu0 0.0
    %396 = vmatprep.mubr.f32.mxu0 0.0
    %397 = vmatmul.mubr.f32.gmra.mrb[0].mxu0 %v330
    %v398 = vpop.f32.mrb[0].mxu0
    %v399 = vadd.f32 0.0, %v398
    %v400 = vpop.f32.mrb[0].mxu0
    %401 = vdwg.mxu0
    %s402 = scalar_lea.vmem [#allocation2], 8
    %403 = vst.msk [vmem:[%s402] sm:$0xff] %vm230, %v399
    %v404 = vsel %vm230, %v399, -inf
    %405 = vmax.xlane.f32.xlu0 %v404
    %v406 = vpop.xlane.xlu0 %405
    %s407 = scalar_lea.vmem %s5, 8
    %v408 = vld [vmem:[%s407] sm:$0xff]
    %v409 = vmax.f32 %v408, %v406
    %410 = vst.msk [vmem:[%s407] sm:$0xff] %vm237, %v409
    // Predicated region
    $region22: #{tpu_custom_call.1} parent=1 // pred_check
      _
    $region23: #{tpu_custom_call.1} parent=1 // pred_check_branch
      %412 = sbr.rel (0) target = $region25
    $region24: #{tpu_custom_call.1} parent=1 // pred_region
      %s414 = ssub.s32 256, 256
      %415 = vsyncadd [#allocation3], %s414
      %s416 = sshll.u32 [#allocation2], 4
      %s417 = int_to_ptr.vmem [resolvable:$true] %s416
      %422 = dma.vmem_to_hbm [thread:$0]  %s417, 256, %s4, [#allocation3], 128, 128, 8
    $region25: #{tpu_custom_call.1} parent=1 // pred_fallthru
      _
    // Predicated region
    $region26: #{tpu_custom_call.1} parent=1 // pred_check
      _
    $region27: #{tpu_custom_call.1} parent=1 // pred_check_branch
      %424 = sbr.rel (0) target = $region29
    $region28: #{tpu_custom_call.1} parent=1 // pred_region
      _
    $region29: #{tpu_custom_call.1} parent=1 // pred_fallthru
      _
    // Predicated region
    $region30: #{tpu_custom_call.1} parent=1 // pred_check
      _
    $region31: #{tpu_custom_call.1} parent=1 // pred_check_branch
      %426 = sbr.rel (0) target = $region33
    $region32: #{tpu_custom_call.1} parent=1 // pred_region
      %427 = dma.done [#allocation3], 256
    $region33: #{tpu_custom_call.1} parent=1 // pred_fallthru
      _
    // Predicated region
    $region34: #{tpu_custom_call.1} parent=1 // pred_check
      _
    $region35: #{tpu_custom_call.1} parent=1 // pred_check_branch
      %429 = sbr.rel (0) target = $region37
    $region36: #{tpu_custom_call.1} parent=1 // pred_region
      _
    $region37: #{tpu_custom_call.1} parent=1 // pred_fallthru
      _
    %430 = vsyncpa [#allocation3], 1

</llo_original>
